<compile_context>
chip_gen: v7x
topology: tpu7x:2x2x1
jax: 0.10.0
libtpu: 0.0.40
codegen_flags: <defaults>
</compile_context>

<pallas_src>
import math

import jax
import jax.numpy as jnp
from jax.experimental import pallas as pl
from jax.experimental.pallas import tpu as pltpu


_LANES = 512                            # preferred lane-dense last dim
_TARGET_TILE_BYTES = 4 * 1024 * 1024    # per-array tile (f32 sizing)
_VMEM_LIMIT_BYTES = 48 * 1024 * 1024    # 3 arrays x 2 buffers x 4 MiB + headroom


def _round_up(x, m):
    return ((x + m - 1) // m) * m


def _logreg_kernel(params_ref, m_ref, t_ref, o_ref):
    # params_ref: (3,) f32 in SMEM via scalar prefetch: [alpha, beta, lambd].
    alpha = params_ref[0]
    beta = params_ref[1]
    lambd = params_ref[2]

    # Compute in f32 regardless of storage dtype (v5e has no bf16 VPU/EUP).
    m = m_ref[...].astype(jnp.float32)
    t = t_ref[...].astype(jnp.float32)

    linear = alpha * m - beta * jnp.exp(lambd * t)
    # sigmoid(x) == 0.5 * tanh(0.5 * x) + 0.5  -> single EUP op, no divide.
    out = 0.5 * jnp.tanh(0.5 * linear) + 0.5
    o_ref[...] = out.astype(o_ref.dtype)


def _fast_2d(total):
    """Copy-free lane-dense (rows, cols) reshape of a contiguous array, or None."""
    for cols in (_LANES, 256, 128):
        if total >= cols and total % cols == 0:
            return total // cols, cols
    return None


def _row_tiling(rows, cols, *, allow_pad):
    """Pick (tile_rows, num_tiles, padded_rows) for a (rows, cols) f32-ish slab."""
    target_rows = max(8, _TARGET_TILE_BYTES // (cols * 4))
    if rows <= 8:
        # Single full-extent tile (block dim == full array dim is always legal).
        return rows, 1, rows
    # Prefer >= 2 tiles so v7x can shard the grid across its two TensorCores.
    tile_rows = min(target_rows, _round_up(pl.cdiv(rows, 2), 8))
    num_tiles = pl.cdiv(rows, tile_rows)
    if allow_pad:
        # Re-balance so per-tile padding stays < 8 rows (no 2x blow-up).
        tile_rows = _round_up(pl.cdiv(rows, num_tiles), 8)
        padded_rows = num_tiles * tile_rows
    else:
        padded_rows = rows  # last block may be partial; Pallas masks it.
    return tile_rows, num_tiles, padded_rows


def _launch(params, m2, t2, tile_rows, num_tiles, out_dtype):
    rows, cols = m2.shape
    data_spec = pl.BlockSpec((tile_rows, cols), lambda i, prm: (i, 0))
    return pl.pallas_call(
        _logreg_kernel,
        out_shape=jax.ShapeDtypeStruct((rows, cols), out_dtype),
        grid_spec=pltpu.PrefetchScalarGridSpec(
            num_scalar_prefetch=1,          # params -> SMEM, loop-invariant
            grid=(num_tiles,),
            in_specs=[data_spec, data_spec],
            out_specs=data_spec,
        ),
        compiler_params=pltpu.CompilerParams(
            dimension_semantics=("parallel",),
            vmem_limit_bytes=_VMEM_LIMIT_BYTES,
        ),
    )(params, m2, t2)


@jax.jit
def logistic_regression_forward(alpha, beta, lambd, m_last, t):
    """Pallas TPU forward of LogisticRegressionModel.

    alpha, beta, lambd: scalar parameters (shape (1,) like torch.randn(1)).
    m_last, t: arrays of identical shape (any shape); float32 or bfloat16.
    """
    assert m_last.shape == t.shape, "m_last and t must have the same shape"
    orig_shape = m_last.shape
    out_dtype = m_last.dtype
    total = math.prod(orig_shape) if orig_shape else 1

    params = jnp.concatenate([
        jnp.asarray(alpha, jnp.float32).reshape(-1)[:1],
        jnp.asarray(beta, jnp.float32).reshape(-1)[:1],
        jnp.asarray(lambd, jnp.float32).reshape(-1)[:1],
    ])  # (3,) f32 scalar-prefetch operand

    fast = _fast_2d(total)
    if fast is not None:
        # No-pad fast path: copy-free reshape, no slice on the way out.
        rows, cols = fast
        tile_rows, num_tiles, _ = _row_tiling(rows, cols, allow_pad=False)
        m2 = m_last.reshape(rows, cols)
        t2 = t.reshape(rows, cols)
        out = _launch(params, m2, t2, tile_rows, num_tiles, out_dtype)
        return out.reshape(orig_shape)

    # Ragged path: pad the flat remainder only (bounded to <8 rows/tile waste).
    cols = _LANES
    rows = pl.cdiv(total, cols)
    tile_rows, num_tiles, padded_rows = _row_tiling(rows, cols, allow_pad=True)
    padded_total = padded_rows * cols

    def _prep(x):
        x = jnp.ravel(x)
        x = jnp.pad(x, (0, padded_total - total))
        return x.reshape(padded_rows, cols)

    out = _launch(params, _prep(m_last), _prep(t), tile_rows, num_tiles, out_dtype)
    return out.reshape(-1)[:total].reshape(orig_shape)


if __name__ == "__main__":
    key = jax.random.PRNGKey(0)
    k_a, k_b, k_l, k_m, k_t, k_m2, k_t2 = jax.random.split(key, 7)

    # Parameters: same shapes as the nn.Module (torch.randn(1) each).
    alpha = jax.random.normal(k_a, (1,), jnp.float32)
    beta = jax.random.normal(k_b, (1,), jnp.float32)
    lambd = jax.random.normal(k_l, (1,), jnp.float32)

    def ref_fn(m, t):
        return jax.nn.sigmoid(alpha[0] * m - beta[0] * jnp.exp(lambd[0] * t))

    # Case 1: lane-dense shape (exercises the no-pad fast path).
    B, N = 8, 128
    m_last = jax.random.normal(k_m, (B, N), jnp.float32)
    t = jax.random.uniform(k_t, (B, N), jnp.float32)
    out = jax.block_until_ready(
        logistic_regression_forward(alpha, beta, lambd, m_last, t))
    ref = ref_fn(m_last, t)
    assert out.shape == ref.shape
    assert jnp.allclose(out, ref, atol=1e-5, rtol=1e-5), "mismatch (fast path)"

    # Case 2: ragged shape (exercises the padded path).
    m_r = jax.random.normal(k_m2, (7, 33), jnp.float32)
    t_r = jax.random.uniform(k_t2, (7, 33), jnp.float32)
    out_r = jax.block_until_ready(
        logistic_regression_forward(alpha, beta, lambd, m_r, t_r))
    ref_r = ref_fn(m_r, t_r)
    assert out_r.shape == ref_r.shape
    assert jnp.allclose(out_r, ref_r, atol=1e-5, rtol=1e-5), "mismatch (pad path)"

    print("KERNEL_OK")
</pallas_src>

<mosaic_0001>
module attributes {stable_mosaic.version = 11 : i64} {
  func.func @_logreg_kernel(%arg0: i32, %arg1: memref<3xf32, #tpu.memory_space<smem>>, %arg2: memref<2x512xf32, #tpu.memory_space<vmem>>, %arg3: memref<2x512xf32, #tpu.memory_space<vmem>>, %arg4: memref<2x512xf32, #tpu.memory_space<vmem>>) attributes {dimension_semantics = [#tpu.dimension_semantics<parallel>], iteration_bounds = array<i64: 1>, scalar_prefetch = 1 : i64, scratch_operands = 0 : i64, tpu.core_type = #tpu.core_type<tc>, window_params = [{transform_indices = @transform_0, window_bounds = array<i64: 2, 512>}, {transform_indices = @transform_1, window_bounds = array<i64: 2, 512>}, {transform_indices = @transform_2, window_bounds = array<i64: 2, 512>}]} {
    %c0 = arith.constant 0 : index
    %0 = memref.load %arg1[%c0] : memref<3xf32, #tpu.memory_space<smem>>
    %c1 = arith.constant 1 : index
    %1 = memref.load %arg1[%c1] : memref<3xf32, #tpu.memory_space<smem>>
    %c2 = arith.constant 2 : index
    %2 = memref.load %arg1[%c2] : memref<3xf32, #tpu.memory_space<smem>>
    %c0_0 = arith.constant 0 : index
    %c0_1 = arith.constant 0 : index
    %3 = vector.load %arg2[%c0_0, %c0_1] : memref<2x512xf32, #tpu.memory_space<vmem>>, vector<2x512xf32>
    %c0_2 = arith.constant 0 : index
    %c0_3 = arith.constant 0 : index
    %4 = vector.load %arg3[%c0_2, %c0_3] : memref<2x512xf32, #tpu.memory_space<vmem>>, vector<2x512xf32>
    %5 = vector.broadcast %0 : f32 to vector<2x512xf32>
    %6 = arith.mulf %5, %3 : vector<2x512xf32>
    %7 = vector.broadcast %2 : f32 to vector<2x512xf32>
    %8 = arith.mulf %7, %4 : vector<2x512xf32>
    %9 = math.exp %8 : vector<2x512xf32>
    %10 = vector.broadcast %1 : f32 to vector<2x512xf32>
    %11 = arith.mulf %10, %9 : vector<2x512xf32>
    %12 = arith.subf %6, %11 : vector<2x512xf32>
    %cst = arith.constant 5.000000e-01 : f32
    %13 = vector.broadcast %cst : f32 to vector<2x512xf32>
    %14 = arith.mulf %13, %12 : vector<2x512xf32>
    %15 = math.tanh %14 : vector<2x512xf32>
    %cst_4 = arith.constant 5.000000e-01 : f32
    %16 = vector.broadcast %cst_4 : f32 to vector<2x512xf32>
    %17 = arith.mulf %16, %15 : vector<2x512xf32>
    %cst_5 = arith.constant 5.000000e-01 : f32
    %18 = vector.broadcast %cst_5 : f32 to vector<2x512xf32>
    %19 = arith.addf %17, %18 : vector<2x512xf32>
    %c0_6 = arith.constant 0 : index
    %c0_7 = arith.constant 0 : index
    %20 = vector.load %arg4[%c0_6, %c0_7] : memref<2x512xf32, #tpu.memory_space<vmem>>, vector<2x512xf32>
    tpu.vector_store %arg4[%c0_6, %c0_7], %19 {strides = array<i32>} : memref<2x512xf32, #tpu.memory_space<vmem>>, vector<2x512xf32>,
    return
  }
  func.func @transform_0(%arg0: i32, %arg1: memref<3xf32, #tpu.memory_space<smem>>) -> (i32, i32) {
    %c0_i32 = arith.constant 0 : i32
    %c0_i32_0 = arith.constant 0 : i32
    return %arg0, %c0_i32 : i32, i32
  }
  func.func @transform_1(%arg0: i32, %arg1: memref<3xf32, #tpu.memory_space<smem>>) -> (i32, i32) {
    %c0_i32 = arith.constant 0 : i32
    %c0_i32_0 = arith.constant 0 : i32
    return %arg0, %c0_i32 : i32, i32
  }
  func.func @transform_2(%arg0: i32, %arg1: memref<3xf32, #tpu.memory_space<smem>>) -> (i32, i32) {
    %c0_i32 = arith.constant 0 : i32
    %c0_i32_0 = arith.constant 0 : i32
    return %arg0, %c0_i32 : i32, i32
  }
}

</mosaic_0001>

<llo_original>
// kernel: logistic_regression_forward.1
$region0: #{logistic_regression_forward.1}
  #allocation0 [shape = 'u32[]', space=smem, size = 0x4, offset = 0x4, fixed_abs, tag = 'smem constant byte address 0x4 - core index']
  #allocation1 [shape = 'u32[144,128]{1,0:T(1,128)}', space=vmem, size = 0x12000, scoped, tag = 'internal scratch']
  #allocation2 [shape = 's32[1]{0}', space=sflag, size = 0x4, scoped, tag = 'scoped memory for logistic_regression_forward.1']
  #allocation3 [shape = 'u8[512]{0}', space=smem, size = 0x200, scoped, tag = 'prefetched SMEM operand 0']
  %s0 = inlined_call_operand.vmem [shape: f32[3], index: 0, kind: input, shape index: {}]
  %s1 = inlined_call_operand.vmem [shape: f32[2,512], index: 1, kind: input, shape index: {}]
  %s2 = inlined_call_operand.vmem [shape: f32[2,512], index: 2, kind: input, shape index: {}]
  %s3 = inlined_call_operand.vmem [shape: f32[2,512], index: 3, kind: output, shape index: {}]
  %s4 = sld [smem:[#allocation0]]
  $region18: #{logistic_regression_forward.1} parent=0
    _
  %s6 = ssub.s32 1, %s4
  %s7 = scalar_select 0, %s6, %s4
  %s8 = sshll.u32 %s0, 4
  %s9 = int_to_ptr.vmem [resolvable:$true] %s8
  %11 = dma.vmem_to_smem %s9, 16, [#allocation3], [#allocation2]
  %12 = dma.done [#allocation2], 16
  %13 = sfence
  // Predicated region
  $region2: #{logistic_regression_forward.1} parent=0 // pred_check
    _
  $region3: #{logistic_regression_forward.1} parent=0 // pred_check_branch
    %15 = sbr.rel (0) target = $region5
  $region4: #{logistic_regression_forward.1} parent=0 // pred_region
    _
  $region5: #{logistic_regression_forward.1} parent=0 // pred_fallthru
    _
  // Predicated region
  $region6: #{logistic_regression_forward.1} parent=0 // pred_check
    _
  $region7: #{logistic_regression_forward.1} parent=0 // pred_check_branch
    %17 = sbr.rel (0) target = $region9
  $region8: #{logistic_regression_forward.1} parent=0 // pred_region
    _
  $region9: #{logistic_regression_forward.1} parent=0 // pred_fallthru
    _
  %s18 = sld [smem:[#allocation3]]
  %s19 = sld [smem:[#allocation3 + $0x1]]
  %s20 = sld [smem:[#allocation3 + $0x2]]
  %v21 = vld [vmem:[%s1] sm:$0xff]
  %v22 = vld [vmem:[%s2] sm:$0xff]
  %v23 = vstv %s18
  %v24 = vmul.f32 %v23, %v21
  %v25 = vstv %s20
  %v26 = vmul.f32 %v25, %v22
  %v27 = vmul.f32 %v26, 1.442695
  %v28 = vpow.pop %v27
  %v29 = vstv %s19
  %v30 = vmul.f32 %v29, %v28
  %v31 = vsub.f32 %v24, %v30
  %v32 = vmul.f32 %v31, 0.5
  %v33 = vtanh.pop %v32
  %v34 = vmul.f32 %v33, 0.5
  %v35 = vadd.f32 %v34, 0.5
  %36 = vst [vmem:[%s3] sm:$0xff] %v35
  // Predicated region
  $region10: #{logistic_regression_forward.1} parent=0 // pred_check
    _
  $region11: #{logistic_regression_forward.1} parent=0 // pred_check_branch
    %38 = sbr.rel (0) target = $region13
  $region12: #{logistic_regression_forward.1} parent=0 // pred_region
    _
  $region13: #{logistic_regression_forward.1} parent=0 // pred_fallthru
    _
  // Predicated region
  $region14: #{logistic_regression_forward.1} parent=0 // pred_check
    _
  $region15: #{logistic_regression_forward.1} parent=0 // pred_check_branch
    %40 = sbr.rel (0) target = $region17
  $region16: #{logistic_regression_forward.1} parent=0 // pred_region
    _
  $region17: #{logistic_regression_forward.1} parent=0 // pred_fallthru
    _

</llo_original>
